<compile_context>
chip_gen: v6e
topology: v6e:2x2x1
jax: 0.10.0
libtpu: 0.0.40
codegen_flags: <defaults>
</compile_context>

<pallas_src>
import functools

import jax
import jax.numpy as jnp
from jax import lax
from jax.experimental import pallas as pl
from jax.experimental.pallas import tpu as pltpu

_LANES = 128
_SUBLANES = 8
_EPS = 1e-8
_MAX_BLOCK_ROWS = 512  # 512 x 128 f32 = 256 KiB per block buffer


# ----------------------------------------------------------------------------
# Wrapper-side helpers
# ----------------------------------------------------------------------------
@functools.lru_cache(maxsize=None)
def _num_reduction_splits():
    """2-way reduction split only on multi-TensorCore chips (v7x)."""
    try:
        kind = jax.devices()[0].device_kind.lower()
    except Exception:  # pragma: no cover - defensive
        return 1
    return 2 if ("v7" in kind or "7x" in kind) else 1


def _pick_block_rows(n_elems):
    rows = -(-n_elems // _LANES)
    rows = -(-rows // _SUBLANES) * _SUBLANES
    return max(_SUBLANES, min(_MAX_BLOCK_ROWS, rows))


def _layout(n_elems):
    """Tiling plan: (block_rows, n_blocks, num_splits, total_rows)."""
    block_rows = _pick_block_rows(n_elems)
    rows = -(-n_elems // _LANES)
    n_blocks = max(1, -(-rows // block_rows))
    num_splits = _num_reduction_splits()
    if num_splits > 1 and n_blocks >= 2 * num_splits:
        n_blocks = -(-n_blocks // num_splits) * num_splits
    else:
        num_splits = 1
    total_rows = n_blocks * block_rows
    return block_rows, n_blocks, num_splits, total_rows


def _to_slab(x, total_rows):
    """Flatten + zero-pad (only if needed) + reshape to lane-dense [rows,128].

    Keeps the source dtype (bf16 inputs stay bf16 in HBM; the kernel upcasts).
    """
    flat = jnp.ravel(x)
    pad = total_rows * _LANES - flat.shape[0]
    if pad:
        flat = jnp.pad(flat, (0, pad))
    return flat.reshape(total_rows, _LANES)


# ----------------------------------------------------------------------------
# Pallas kernels
# ----------------------------------------------------------------------------
def _bce_sum_kernel(p_ref, t_ref, out_ref, *, n_strips):
    """Accumulate sum of element-wise BCE into a resident (8,128) f32 output."""

    @pl.when(pl.program_id(1) == 0)
    def _():
        out_ref[...] = jnp.zeros_like(out_ref)

    def strip(s, acc):
        r = pl.multiple_of(s * _SUBLANES, _SUBLANES)
        p = p_ref[pl.ds(r, _SUBLANES), :].astype(jnp.float32)
        t = t_ref[pl.ds(r, _SUBLANES), :].astype(jnp.float32)
        # PyTorch F.binary_cross_entropy clamps the log terms at -100.
        log_p = jnp.maximum(jnp.log(p), -100.0)
        log_1mp = jnp.maximum(jnp.log(1.0 - p), -100.0)
        return acc - (t * log_p + (1.0 - t) * log_1mp)

    zero = jnp.zeros((_SUBLANES, _LANES), jnp.float32)
    out_ref[...] += lax.fori_loop(0, n_strips, strip, zero, unroll=True)


def _reg_sums_kernel(p_ref, sum_p_ref, sum_ent_ref, *, n_strips):
    """Accumulate sum(p) and sum(p*log(p+eps)+(1-p)*log(1-p+eps))."""

    @pl.when(pl.program_id(1) == 0)
    def _():
        sum_p_ref[...] = jnp.zeros_like(sum_p_ref)
        sum_ent_ref[...] = jnp.zeros_like(sum_ent_ref)

    def strip(s, carry):
        acc_p, acc_e = carry
        r = pl.multiple_of(s * _SUBLANES, _SUBLANES)
        p = p_ref[pl.ds(r, _SUBLANES), :].astype(jnp.float32)
        ent = p * jnp.log(p + _EPS) + (1.0 - p) * jnp.log(1.0 - p + _EPS)
        return acc_p + p, acc_e + ent

    zero = jnp.zeros((_SUBLANES, _LANES), jnp.float32)
    part_p, part_e = lax.fori_loop(0, n_strips, strip, (zero, zero),
                                   unroll=True)
    sum_p_ref[...] += part_p
    sum_ent_ref[...] += part_e


# ----------------------------------------------------------------------------
# pallas_call wrappers (one call per tensor)
# ----------------------------------------------------------------------------
def _reduction_call(kernel, slabs, n_outputs, block_rows, n_blocks,
                    num_splits):
    blocks_per_split = n_blocks // num_splits
    in_spec = pl.BlockSpec((block_rows, _LANES),
                           lambda c, i: (c * blocks_per_split + i, 0))
    out_spec = pl.BlockSpec((_SUBLANES, _LANES), lambda c, i: (c, 0))

    outs = pl.pallas_call(
        kernel,
        out_shape=tuple(
            jax.ShapeDtypeStruct((num_splits * _SUBLANES, _LANES), jnp.float32)
            for _ in range(n_outputs)),
        grid_spec=pltpu.PrefetchScalarGridSpec(
            num_scalar_prefetch=0,
            grid=(num_splits, blocks_per_split),
            in_specs=[in_spec] * len(slabs),
            out_specs=tuple(out_spec for _ in range(n_outputs)),
            scratch_shapes=[]),
        compiler_params=pltpu.CompilerParams(
            dimension_semantics=("parallel", "arbitrary")),
    )(*slabs)
    return outs


def _bce_mean(pred, target):
    """Mean binary cross-entropy (matches torch.nn.functional.binary_cross_entropy)."""
    n = int(pred.size)
    block_rows, n_blocks, num_splits, total_rows = _layout(n)
    p_slab = _to_slab(pred, total_rows)
    t_slab = _to_slab(target, total_rows)
    kernel = functools.partial(_bce_sum_kernel,
                               n_strips=block_rows // _SUBLANES)
    outs = _reduction_call(kernel, [p_slab, t_slab], 1,
                           block_rows, n_blocks, num_splits)
    acc = outs[0]
    # Padded elements (p=0, t=0) contribute exactly 0 with the -100 log clamp.
    return jnp.sum(acc) / jnp.float32(n)


def _reg_loss(pred):
    """sparsity_penalty + 0.1 * confidence_penalty (regularization mode)."""
    n = int(pred.size)
    block_rows, n_blocks, num_splits, total_rows = _layout(n)
    p_slab = _to_slab(pred, total_rows)
    kernel = functools.partial(_reg_sums_kernel,
                               n_strips=block_rows // _SUBLANES)
    acc_p, acc_e = _reduction_call(kernel, [p_slab], 2,
                                   block_rows, n_blocks, num_splits)
    n_pad = total_rows * _LANES - n
    # Each padded element (p == 0) contributes 0*log(eps) + 1*log(1+eps) to the
    # entropy sum (exactly 0.0 in f32); subtract analytically instead of masking.
    pad_ent = jnp.float32(n_pad) * jnp.log(jnp.float32(1.0) + jnp.float32(_EPS))
    inv_n = 1.0 / jnp.float32(n)
    sparsity_penalty = jnp.sum(acc_p) * inv_n
    confidence_penalty = -((jnp.sum(acc_e) - pad_ent) * inv_n)
    return sparsity_penalty + 0.1 * confidence_penalty


class GroundingLoss:
    """JAX/Pallas port of the PyTorch GroundingLoss module (forward only)."""

    def __init__(self, alpha=1.0, beta=1.0, gamma=1.0):
        self.alpha = alpha
        self.beta = beta
        self.gamma = gamma  # unused in forward, kept for parity with __init__

    def __call__(self, grounding_outputs, grounding_targets=None):
        total_loss = jnp.float32(0.0)
        loss_components = {}
        if grounding_targets is not None:
            if ('image_grounding' in grounding_outputs
                    and 'image_grounding' in grounding_targets):
                image_loss = _bce_mean(grounding_outputs['image_grounding'],
                                       grounding_targets['image_grounding'])
                total_loss = total_loss + self.alpha * image_loss
                loss_components['image_grounding_loss'] = image_loss
            if ('text_grounding' in grounding_outputs
                    and 'text_grounding' in grounding_targets):
                text_loss = _bce_mean(grounding_outputs['text_grounding'],
                                      grounding_targets['text_grounding'])
                total_loss = total_loss + self.beta * text_loss
                loss_components['text_grounding_loss'] = text_loss
        else:
            if 'image_grounding' in grounding_outputs:
                image_loss = _reg_loss(grounding_outputs['image_grounding'])
                total_loss = total_loss + self.alpha * image_loss
                loss_components['image_regularization'] = image_loss
            if 'text_grounding' in grounding_outputs:
                text_loss = _reg_loss(grounding_outputs['text_grounding'])
                total_loss = total_loss + self.beta * text_loss
                loss_components['text_regularization'] = text_loss
        return total_loss, loss_components


# ----------------------------------------------------------------------------
# Main
# ----------------------------------------------------------------------------
if __name__ == "__main__":
    key = jax.random.PRNGKey(0)
    k1, k2, k3, k4 = jax.random.split(key, 4)

    B, H, W, L = 2, 16, 16, 8
    # Grounding maps are probabilities (as produced by a sigmoid upstream).
    image_grounding = jax.nn.sigmoid(
        jax.random.normal(k1, (B, 1, H, W), dtype=jnp.float32))
    text_grounding = jax.nn.sigmoid(
        jax.random.normal(k2, (B, L), dtype=jnp.float32))
    image_target = jax.random.uniform(k3, (B, 1, H, W), dtype=jnp.float32)
    text_target = jax.random.uniform(k4, (B, L), dtype=jnp.float32)

    loss_fn = GroundingLoss(alpha=1.0, beta=1.0, gamma=1.0)

    outputs = {'image_grounding': image_grounding,
               'text_grounding': text_grounding}
    targets = {'image_grounding': image_target,
               'text_grounding': text_target}

    # Supervised mode (with targets): BCE losses.
    total_sup, comps_sup = loss_fn(outputs, targets)
    total_sup = jax.block_until_ready(total_sup)

    # Unsupervised mode (no targets): sparsity + confidence regularization.
    total_reg, comps_reg = loss_fn(outputs, None)
    total_reg = jax.block_until_ready(total_reg)

    # Reference check in plain JAX.
    def ref_bce(p, t):
        lp = jnp.maximum(jnp.log(p), -100.0)
        l1 = jnp.maximum(jnp.log(1.0 - p), -100.0)
        return jnp.mean(-(t * lp + (1.0 - t) * l1))

    def ref_reg(p):
        sp = jnp.mean(p)
        cp = -jnp.mean(p * jnp.log(p + _EPS) + (1 - p) * jnp.log(1 - p + _EPS))
        return sp + 0.1 * cp

    ref_sup = ref_bce(image_grounding, image_target) + ref_bce(
        text_grounding, text_target)
    ref_unsup = ref_reg(image_grounding) + ref_reg(text_grounding)

    assert jnp.allclose(total_sup, ref_sup, atol=1e-5, rtol=1e-5), (
        total_sup, ref_sup)
    assert jnp.allclose(total_reg, ref_unsup, atol=1e-5, rtol=1e-5), (
        total_reg, ref_unsup)
    assert jnp.allclose(comps_sup['image_grounding_loss'],
                        ref_bce(image_grounding, image_target),
                        atol=1e-5, rtol=1e-5)
    assert jnp.allclose(comps_reg['text_regularization'],
                        ref_reg(text_grounding), atol=1e-5, rtol=1e-5)

    print("KERNEL_OK")
</pallas_src>

<mosaic_0001>
module attributes {stable_mosaic.version = 11 : i64} {
  func.func @_bce_sum_kernel(%arg0: i32, %arg1: i32, %arg2: memref<8x128xf32, #tpu.memory_space<vmem>>, %arg3: memref<8x128xf32, #tpu.memory_space<vmem>>, %arg4: memref<8x128xf32, #tpu.memory_space<vmem>>) attributes {dimension_semantics = [#tpu.dimension_semantics<parallel>, #tpu.dimension_semantics<arbitrary>], iteration_bounds = array<i64: 1, 1>, scalar_prefetch = 0 : i64, scratch_operands = 0 : i64, tpu.core_type = #tpu.core_type<tc>, window_params = [{transform_indices = @transform_0, window_bounds = array<i64: 8, 128>}, {transform_indices = @transform_1, window_bounds = array<i64: 8, 128>}, {transform_indices = @transform_2, window_bounds = array<i64: 8, 128>}]} {
    %c0_i32 = arith.constant 0 : i32
    %0 = arith.cmpi eq, %arg1, %c0_i32 : i32
    %1 = arith.extui %0 : i1 to i32
    %c0_i32_0 = arith.constant 0 : i32
    %2 = arith.cmpi ne, %1, %c0_i32_0 : i32
    scf.if %2 {
      %cst_11 = arith.constant 0.000000e+00 : f32
      %27 = vector.broadcast %cst_11 : f32 to vector<8x128xf32>
      %c0_12 = arith.constant 0 : index
      %c0_13 = arith.constant 0 : index
      %28 = vector.load %arg4[%c0_12, %c0_13] : memref<8x128xf32, #tpu.memory_space<vmem>>, vector<8x128xf32>
      tpu.vector_store %arg4[%c0_12, %c0_13], %27 {strides = array<i32>} : memref<8x128xf32, #tpu.memory_space<vmem>>, vector<8x128xf32>,
    } else {
    }
    %cst = arith.constant 0.000000e+00 : f32
    %3 = vector.broadcast %cst : f32 to vector<8x128xf32>
    %c0 = arith.constant 0 : index
    %c0_1 = arith.constant 0 : index
    %4 = vector.load %arg4[%c0, %c0_1] : memref<8x128xf32, #tpu.memory_space<vmem>>, vector<8x128xf32>
    %c0_i32_2 = arith.constant 0 : i32
    %c8_i32 = arith.constant 8 : i32
    %5 = arith.muli %c0_i32_2, %c8_i32 : i32
    %6 = tpu.assume_multiple %5, 8 : i32
    %7 = arith.index_cast %6 : i32 to index
    %c0_3 = arith.constant 0 : index
    %8 = vector.load %arg2[%7, %c0_3] : memref<8x128xf32, #tpu.memory_space<vmem>>, vector<8x128xf32>
    %9 = arith.index_cast %6 : i32 to index
    %c0_4 = arith.constant 0 : index
    %10 = vector.load %arg3[%9, %c0_4] : memref<8x128xf32, #tpu.memory_space<vmem>>, vector<8x128xf32>
    %11 = math.log %8 : vector<8x128xf32>
    %cst_5 = arith.constant -1.000000e+02 : f32
    %12 = vector.broadcast %cst_5 : f32 to vector<8x128xf32>
    %13 = arith.maximumf %11, %12 : vector<8x128xf32>
    %cst_6 = arith.constant 1.000000e+00 : f32
    %14 = vector.broadcast %cst_6 : f32 to vector<8x128xf32>
    %15 = arith.subf %14, %8 : vector<8x128xf32>
    %16 = math.log %15 : vector<8x128xf32>
    %cst_7 = arith.constant -1.000000e+02 : f32
    %17 = vector.broadcast %cst_7 : f32 to vector<8x128xf32>
    %18 = arith.maximumf %16, %17 : vector<8x128xf32>
    %19 = arith.mulf %10, %13 : vector<8x128xf32>
    %cst_8 = arith.constant 1.000000e+00 : f32
    %20 = vector.broadcast %cst_8 : f32 to vector<8x128xf32>
    %21 = arith.subf %20, %10 : vector<8x128xf32>
    %22 = arith.mulf %21, %18 : vector<8x128xf32>
    %23 = arith.addf %19, %22 : vector<8x128xf32>
    %24 = arith.subf %3, %23 : vector<8x128xf32>
    %c1_i32 = arith.constant 1 : i32
    %25 = arith.addf %4, %24 : vector<8x128xf32>
    %c0_9 = arith.constant 0 : index
    %c0_10 = arith.constant 0 : index
    %26 = vector.load %arg4[%c0_9, %c0_10] : memref<8x128xf32, #tpu.memory_space<vmem>>, vector<8x128xf32>
    tpu.vector_store %arg4[%c0_9, %c0_10], %25 {strides = array<i32>} : memref<8x128xf32, #tpu.memory_space<vmem>>, vector<8x128xf32>,
    return
  }
  func.func @transform_0(%arg0: i32, %arg1: i32) -> (i32, i32) {
    %c1_i32 = arith.constant 1 : i32
    %0 = arith.muli %arg0, %c1_i32 : i32
    %1 = arith.addi %0, %arg1 : i32
    %c0_i32 = arith.constant 0 : i32
    %c0_i32_0 = arith.constant 0 : i32
    return %1, %c0_i32 : i32, i32
  }
  func.func @transform_1(%arg0: i32, %arg1: i32) -> (i32, i32) {
    %c1_i32 = arith.constant 1 : i32
    %0 = arith.muli %arg0, %c1_i32 : i32
    %1 = arith.addi %0, %arg1 : i32
    %c0_i32 = arith.constant 0 : i32
    %c0_i32_0 = arith.constant 0 : i32
    return %1, %c0_i32 : i32, i32
  }
  func.func @transform_2(%arg0: i32, %arg1: i32) -> (i32, i32) {
    %c0_i32 = arith.constant 0 : i32
    %c0_i32_0 = arith.constant 0 : i32
    return %arg0, %c0_i32 : i32, i32
  }
}

</mosaic_0001>

<llo_original>
// kernel: tpu_custom_call.1
$region0: #{tpu_custom_call.1}
  #allocation0 [shape = 'u32[]', space=smem, size = 0x4, offset = 0x4, fixed_abs, tag = 'smem constant byte address 0x4 - core index']
  #allocation1 [shape = 'u32[144,128]{1,0:T(1,128)}', space=vmem, size = 0x12000, scoped, tag = 'internal scratch']
  %s0 = inlined_call_operand.hbm [shape: f32[8,128], index: 0, kind: input, shape index: {}]
  %s1 = inlined_call_operand.hbm [shape: f32[8,128], index: 1, kind: input, shape index: {}]
  %s2 = inlined_call_operand.hbm [shape: f32[8,128], index: 2, kind: output, shape index: {}]
  %s3 = sld [smem:[#allocation0]]
  $region30: #{tpu_custom_call.1} parent=0
    _
  %s5 = ssub.s32 1, %s3
  %s6 = scalar_select 0, %s5, %s3
  $region1: #{tpu_custom_call.1} parent=0
    #allocation2 [shape = 'u8[4096]{0}', space=vmem, size = 0x1000, scoped, tag = 'input window, operand 0, single buffered']
    #allocation3 [shape = 's32[1]{0}', space=sflag, size = 0x4, scoped, tag = 'scoped memory for tpu_custom_call.1']
    #allocation4 [shape = 's32[1]{0}', space=sflag, size = 0x4, scoped, tag = 'scoped memory for tpu_custom_call.1']
    #allocation5 [shape = 'u8[4096]{0}', space=vmem, size = 0x1000, scoped, tag = 'input window, operand 1, single buffered']
    #allocation6 [shape = 's32[1]{0}', space=sflag, size = 0x4, scoped, tag = 'scoped memory for tpu_custom_call.1']
    #allocation7 [shape = 'u8[4096]{0}', space=vmem, size = 0x1000, scoped, tag = 'output window, operand 0, single buffered']
    %7 = vsyncpa [#allocation3], 0
    %8 = vsyncpa [#allocation6], 0
    %9 = vsyncpa [#allocation4], 0
    // Predicated region
    $region2: #{tpu_custom_call.1} parent=1 // pred_check
      _
    $region3: #{tpu_custom_call.1} parent=1 // pred_check_branch
      %11 = sbr.rel (0) target = $region5
    $region4: #{tpu_custom_call.1} parent=1 // pred_region
      %s12 = sadd.s32 0, 0
      %s14 = ssub.s32 128, 128
      %15 = vsyncadd [#allocation3], %s14
      %s16 = smul.addr %s12, 128
      %s17 = scalar_lea.hbm %s0, %s16
      %s19 = sshll.u32 [#allocation2], 4
      %s20 = int_to_ptr.vmem [resolvable:$true] %s19
      %22 = dma.hbm_to_vmem [thread:$0]  %s17, 128, %s20, [#allocation3]
    $region5: #{tpu_custom_call.1} parent=1 // pred_fallthru
      _
    // Predicated region
    $region6: #{tpu_custom_call.1} parent=1 // pred_check
      _
    $region7: #{tpu_custom_call.1} parent=1 // pred_check_branch
      %24 = sbr.rel (0) target = $region9
    $region8: #{tpu_custom_call.1} parent=1 // pred_region
      %s25 = sadd.s32 0, 0
      %s27 = ssub.s32 128, 128
      %28 = vsyncadd [#allocation6], %s27
      %s29 = smul.addr %s25, 128
      %s30 = scalar_lea.hbm %s1, %s29
      %s32 = sshll.u32 [#allocation5], 4
      %s33 = int_to_ptr.vmem [resolvable:$true] %s32
      %35 = dma.hbm_to_vmem [thread:$0]  %s30, 128, %s33, [#allocation6]
    $region9: #{tpu_custom_call.1} parent=1 // pred_fallthru
      _
    // Predicated region
    $region10: #{tpu_custom_call.1} parent=1 // pred_check
      _
    $region11: #{tpu_custom_call.1} parent=1 // pred_check_branch
      %37 = sbr.rel (0) target = $region13
    $region12: #{tpu_custom_call.1} parent=1 // pred_region
      %38 = dma.done [#allocation3], 128
    $region13: #{tpu_custom_call.1} parent=1 // pred_fallthru
      _
    // Predicated region
    $region14: #{tpu_custom_call.1} parent=1 // pred_check
      _
    $region15: #{tpu_custom_call.1} parent=1 // pred_check_branch
      %40 = sbr.rel (0) target = $region17
    $region16: #{tpu_custom_call.1} parent=1 // pred_region
      %41 = dma.done [#allocation6], 128
    $region17: #{tpu_custom_call.1} parent=1 // pred_fallthru
      _
    %s42 = sadd.s32 0, 0
    %s43 = sadd.s32 0, 0
    %p44 = scmp.eq.s32.totalorder 0, 0
    // Predicated region
    $region18: #{tpu_custom_call.1} parent=1 // pred_check
      %p45 = pneg %p44
    $region19: #{tpu_custom_call.1} parent=1 // pred_check_branch
      %47 = sbr.rel (%p45) target = $region21
    $region20: #{tpu_custom_call.1} parent=1 // pred_region
      %48 = vst [vmem:[#allocation7] sm:$0xff] 0.0
    $region21: #{tpu_custom_call.1} parent=1 // pred_fallthru
      _
    %v49 = vld [vmem:[#allocation7] sm:$0xff]
    %v50 = vld [vmem:[#allocation2] sm:$0xff]
    %v51 = vld [vmem:[#allocation5] sm:$0xff]
    %v52 = vlog2.pop %v50
    %v53 = vmul.f32 %v52, 0.6931472
    %v54 = vmax.f32 %v53, -100.0
    %v55 = vsub.f32 1.0, %v50
    %v56 = vlog2.pop %v55
    %v57 = vmul.f32 %v56, 0.6931472
    %v58 = vmax.f32 %v57, -100.0
    %v59 = vmul.f32 %v51, %v54
    %v60 = vsub.f32 1.0, %v51
    %v61 = vmul.f32 %v60, %v58
    %v62 = vadd.f32 %v59, %v61
    %v63 = vsub.f32 0.0, %v62
    %v64 = vadd.f32 %v49, %v63
    %65 = vst [vmem:[#allocation7] sm:$0xff] %v64
    // Predicated region
    $region22: #{tpu_custom_call.1} parent=1 // pred_check
      _
    $region23: #{tpu_custom_call.1} parent=1 // pred_check_branch
      %67 = sbr.rel (0) target = $region25
    $region24: #{tpu_custom_call.1} parent=1 // pred_region
      %s69 = ssub.s32 128, 128
      %70 = vsyncadd [#allocation4], %s69
      %s72 = sshll.u32 [#allocation7], 4
      %s73 = int_to_ptr.vmem [resolvable:$true] %s72
      %75 = dma.vmem_to_hbm [thread:$0]  %s73, 128, %s2, [#allocation4]
    $region25: #{tpu_custom_call.1} parent=1 // pred_fallthru
      _
    // Predicated region
    $region26: #{tpu_custom_call.1} parent=1 // pred_check
      _
    $region27: #{tpu_custom_call.1} parent=1 // pred_check_branch
      %77 = sbr.rel (0) target = $region29
    $region28: #{tpu_custom_call.1} parent=1 // pred_region
      %78 = dma.done [#allocation4], 128
    $region29: #{tpu_custom_call.1} parent=1 // pred_fallthru
      _
    %79 = vsyncpa [#allocation3], 1
    %80 = vsyncpa [#allocation6], 1
    %81 = vsyncpa [#allocation4], 1

</llo_original>
